<compile_context>
chip_gen: v5e
topology: v5e:2x2
jax: 0.10.0
libtpu: 0.0.40
codegen_flags: <defaults>
</compile_context>

<pallas_src>
import math

import jax
import jax.numpy as jnp
from jax.experimental import pallas as pl
from jax.experimental.pallas import tpu as pltpu


# ----------------------------------------------------------------------------
# Pallas kernel (one row stripe): growth field + reduction over nb_k kernels
# + wall field + 1/T update + clamp.  Purely elementwise + EUP (exp); the
# kernel is HBM-bandwidth bound.
# ----------------------------------------------------------------------------
def _make_lenia_update_kernel(C, nb_k):
    def kernel(m_ref, ninv2s2_ref, coef_ref, scal_ref, pot_ref, x_ref, o_ref):
        # m_ref, ninv2s2_ref, coef_ref : SMEM (nb_k,) f32
        #   coef_k     = 2 * h_k * exp(-0.001)
        #   ninv2s2_k  = -0.5 / (s_k * s_k)
        # scal_ref : SMEM (2,) f32 -> [1/T, sum(h)]
        # pot_ref  : VMEM (nb_k + 1, tile_rows, SY)  growth potentials (0..nb_k-1)
        #            + wall potential (index nb_k); circular roll already folded
        #            into the kernel FFTs.
        # x_ref    : VMEM (C, tile_rows, SY) input state planes
        # o_ref    : VMEM (C, tile_rows, SY) output state planes
        inv_t = scal_ref[0]
        sum_h = scal_ref[1]

        # field_func[1] (gn=1) with constants folded:
        #   sum_k h_k * (2*exp(-(n-m_k)^2/(2 s_k^2) - 0.001) - 1)
        #     = sum_k coef_k * exp((n-m_k)^2 * ninv2s2_k) - sum(h)
        d = pot_ref[0] - m_ref[0]
        acc = coef_ref[0] * jnp.exp(d * d * ninv2s2_ref[0])
        for k in range(1, nb_k):              # nb_k small & static -> unrolled
            d = pot_ref[k] - m_ref[k]
            acc = acc + coef_ref[k] * jnp.exp(d * d * ninv2s2_ref[k])
        growth = acc - sum_h

        # field_func[3] for the wall/obstacle potential: -clamp(n - 1e-8, 0, 1)*10
        wall = jnp.clip(pot_ref[nb_k] - 1e-8, 0.0, 1.0) * (-10.0)

        # channel 0: growth + wall
        o_ref[0] = jnp.clip(x_ref[0] + inv_t * (growth + wall), 0.0, 1.0)
        # channels 1 .. C-2: wall field only
        for c in range(1, C - 1):
            o_ref[c] = jnp.clip(x_ref[c] + inv_t * wall, 0.0, 1.0)
        # last channel (obstacle map): unchanged except the clamp.  Kept
        # in-kernel so one stacked planar state comes out (cheaper than an
        # extra XLA concat pass over all planes).
        o_ref[C - 1] = jnp.clip(x_ref[C - 1], 0.0, 1.0)

    return kernel


# ----------------------------------------------------------------------------
# Shift-theorem phase: multiplying the rFFT of the kernel by this factor is
# exactly equivalent to the torch code's post-irfft roll_n by SX//2 / SY//2.
# For even sizes the factor is exactly (+/-1), so the fold is bit-exact.
# ----------------------------------------------------------------------------
def _shift_phase(SX, SY):
    if SX % 2 == 0 and SY % 2 == 0:
        sx = (1.0 - 2.0 * (jnp.arange(SX) % 2)).astype(jnp.float32)          # (-1)^kx
        sy = (1.0 - 2.0 * (jnp.arange(SY // 2 + 1) % 2)).astype(jnp.float32)  # (-1)^ky
        return sx[:, None] * sy[None, :]
    kx = jnp.arange(SX)
    ky = jnp.arange(SY // 2 + 1)
    px = jnp.exp(2j * jnp.pi * kx * (SX // 2) / SX)
    py = jnp.exp(2j * jnp.pi * ky * (SY // 2) / SY)
    return (px[:, None] * py[None, :]).astype(jnp.complex64)


# ----------------------------------------------------------------------------
# Parameter / kernel construction glue (mirrors compute_kernel / compute_kernel_env)
# ----------------------------------------------------------------------------
def _ker_c(x, r3, w3, b3):
    return (b3 * jnp.exp(-((x[..., None] - r3) / w3) ** 2 / 2.0)).sum(-1)


def compute_kernels_fft(SX, SY, R, r, rk, w, b, fold_roll=True):
    x = jnp.arange(SX, dtype=jnp.float32)
    y = jnp.arange(SY, dtype=jnp.float32)
    X = x[:, None] - SX // 2
    Y = y[None, :] - SY // 2
    dist = jnp.sqrt(X ** 2 + Y ** 2)

    def one(ri, rki, wi, bi):
        D = dist / ((R + 15.0) * ri)
        ker = jax.nn.sigmoid(-(D - 1.0) * 10.0) * _ker_c(D, rki, wi, bi)
        ker = ker / jnp.sum(ker)
        return jnp.fft.rfftn(ker, axes=(-2, -1))

    kfft = jax.vmap(one)(r, rk, w, b)            # (nb_k, SX, SY//2+1) complex64
    if fold_roll:
        kfft = kfft * _shift_phase(SX, SY)
    return kfft


def compute_kernel_wall_fft(SX, SY, fold_roll=True):
    x = jnp.arange(SX, dtype=jnp.float32)
    y = jnp.arange(SY, dtype=jnp.float32)
    X = x[:, None] - SX // 2
    Y = y[None, :] - SY // 2
    D = jnp.sqrt(X ** 2 + Y ** 2) / 4.0
    ker = jax.nn.sigmoid(-(D - 1.0) * 10.0) * _ker_c(
        D,
        jnp.array([0.0, 0.0, 0.0], jnp.float32),
        jnp.array([0.5, 0.1, 0.1], jnp.float32),
        jnp.array([1.0, 0.0, 0.0], jnp.float32))
    ker = ker / jnp.sum(ker)
    kfft = jnp.fft.rfftn(ker[None], axes=(-2, -1))   # (1, SX, SY//2+1)
    if fold_roll:
        kfft = kfft * _shift_phase(SX, SY)
    return kfft


# ----------------------------------------------------------------------------
# Per-chip VMEM limit and row-stripe choice.
# ----------------------------------------------------------------------------
def _pick_vmem_limit_bytes():
    phys = 128 * 1024 * 1024
    try:
        info = pltpu.get_tpu_info()
        phys = int(getattr(info, "vmem_capacity_bytes", phys))
    except Exception:
        pass
    if phys <= 64 * 1024 * 1024:      # v7x-class (64 MiB physical VMEM per TC)
        return 48 * 1024 * 1024
    return 64 * 1024 * 1024            # v5e / v6e (128 MiB physical VMEM)


def _pick_tile_rows(SX, SY, C, nb_k, vmem_limit_bytes):
    assert SX % 8 == 0, "SX must be a multiple of 8"
    # Double-buffered per-grid-step operand footprint (pot + state in + state out).
    bytes_per_row = (nb_k + 1 + 2 * C) * SY * 4
    budget = (3 * vmem_limit_bytes) // 4          # headroom for Mosaic scratch
    cap = max(8, SX // 4)                         # >= 4 blocks: keeps both v7x TCs
    best = 8                                      # busy and the DMA pipelined
    for cand in range(8, cap + 1, 8):
        if SX % cand == 0 and 2 * cand * bytes_per_row <= budget:
            best = cand
    return best


# ----------------------------------------------------------------------------
# Core step on a planar (C, SX, SY) state.  FFT convolution in XLA (no Pallas
# FFT primitive), everything downstream in one Pallas call.
# ----------------------------------------------------------------------------
def lenia_step_planar(state_chw, kernels_fft, kernel_wall_fft, m, s, h, T,
                      speed_x=0, speed_y=0, tile_rows=None,
                      vmem_limit_bytes=None):
    C, SX, SY = state_chw.shape
    nb_k = kernels_fft.shape[0]
    assert C >= 2 and SX % 8 == 0 and SY % 2 == 0
    # NOTE: SY a multiple of 128 gives lane-dense (unmasked) stores.

    if vmem_limit_bytes is None:
        vmem_limit_bytes = _pick_vmem_limit_bytes()
    if tile_rows is None:
        tile_rows = _pick_tile_rows(SX, SY, C, nb_k, vmem_limit_bytes)
    assert SX % tile_rows == 0 and tile_rows % 8 == 0

    state_chw = state_chw.astype(jnp.float32)
    # input[:, :, :, 1] = roll(input[:, :, :, 1], [speed_y, speed_x], [1, 2])
    if speed_x != 0 or speed_y != 0:
        state_chw = state_chw.at[1].set(
            jnp.roll(state_chw[1], shift=(speed_y, speed_x), axis=(0, 1)))

    # --- FFT circular convolution (XLA glue). ------------------------------
    # One batched forward rfft (channels 0 and C-1) and one batched inverse
    # rfft for the nb_k growth potentials + the wall potential.  The torch
    # post-irfft circular half-roll is already folded into the kernel FFTs,
    # so no spatial roll remains anywhere.
    if C == 2:
        fft_in = state_chw
    else:
        fft_in = jnp.stack([state_chw[0], state_chw[C - 1]], axis=0)
    wfft = jnp.fft.rfftn(fft_in, axes=(-2, -1))                  # (2, SX, SYh)
    pot_fft = jnp.concatenate([kernels_fft * wfft[0],
                               kernel_wall_fft * wfft[1]], axis=0)
    pot = jnp.fft.irfftn(pot_fft, axes=(-2, -1)).astype(jnp.float32)  # (nb_k+1,SX,SY)
    # TODO(synk): casting pot to bfloat16 would cut ~33% of kernel HBM traffic;
    # needs accuracy validation vs the float64 torch reference for small s.

    # Scalar path: fold the divide, the negation, the *2 and exp(-0.001) out
    # of the per-pixel k-loop.
    m32 = m.astype(jnp.float32)
    s32 = s.astype(jnp.float32)
    h32 = h.astype(jnp.float32)
    neg_inv2s2 = -0.5 / (s32 * s32)
    coef = (2.0 * math.exp(-0.001)) * h32
    scal = jnp.stack([1.0 / jnp.asarray(T, jnp.float32), jnp.sum(h32)])

    nblocks = SX // tile_rows
    smem_spec = pl.BlockSpec(memory_space=pltpu.MemorySpace.SMEM)
    row_map = lambda i: (0, i, 0)

    # NOTE: if profiling shows exposed DMA at stripe boundaries, add
    # pipeline_mode=pl.Buffered(3) on the pot spec only (the dominant stream).
    return pl.pallas_call(
        _make_lenia_update_kernel(C, nb_k),
        out_shape=jax.ShapeDtypeStruct((C, SX, SY), jnp.float32),
        grid=(nblocks,),
        in_specs=[smem_spec, smem_spec, smem_spec, smem_spec,
                  pl.BlockSpec((nb_k + 1, tile_rows, SY), row_map),
                  pl.BlockSpec((C, tile_rows, SY), row_map)],
        out_specs=pl.BlockSpec((C, tile_rows, SY), row_map),
        compiler_params=pltpu.CompilerParams(
            dimension_semantics=("parallel",),
            vmem_limit_bytes=vmem_limit_bytes),
    )(m32, neg_inv2s2, coef, scal, pot, state_chw)


# ----------------------------------------------------------------------------
# NHWC wrapper matching LeniaStepFFTC.forward(state) with state (1, SX, SY, C).
# (Iterated sims should call lenia_step_planar directly and keep the state in
# planar (C, SX, SY) layout between steps to avoid the boundary transposes.)
# ----------------------------------------------------------------------------
def lenia_forward(state, kernels_fft, kernel_wall_fft, m, s, h, T,
                  speed_x=0, speed_y=0, tile_rows=None):
    _, SX, SY, C = state.shape
    state_chw = jnp.transpose(state[0], (2, 0, 1))
    out_chw = lenia_step_planar(state_chw, kernels_fft, kernel_wall_fft,
                                m, s, h, T, speed_x=speed_x, speed_y=speed_y,
                                tile_rows=tile_rows)
    return jnp.transpose(out_chw, (1, 2, 0))[None]


# ----------------------------------------------------------------------------
# Pure-JAX reference (no Pallas, unshifted kernels + explicit post-irfft rolls)
# ----------------------------------------------------------------------------
def lenia_forward_ref(state, kernels_fft, kernel_wall_fft, m, s, h, T,
                      speed_x=0, speed_y=0):
    _, SX, SY, C = state.shape
    state = state.at[:, :, :, 1].set(
        jnp.roll(state[:, :, :, 1], shift=(speed_y, speed_x), axis=(1, 2)))

    wfft0 = jnp.fft.rfftn(state[:, :, :, 0], axes=(-2, -1))
    pot = jnp.fft.irfftn(kernels_fft * wfft0, axes=(-2, -1))
    pot = jnp.roll(pot, shift=(-(SX // 2), -(SY // 2)), axis=(1, 2))
    field = jnp.exp(-(pot - m[:, None, None]) ** 2
                    / (2.0 * s[:, None, None] ** 2) - 0.001) * 2.0 - 1.0
    D = jnp.zeros_like(state)
    D = D.at[:, :, :, 0].set(
        jnp.sum(h[:, None, None] * field, axis=0, keepdims=True))

    wfftw = jnp.fft.rfftn(state[:, :, :, C - 1], axes=(-2, -1))
    potw = jnp.fft.irfftn(kernel_wall_fft * wfftw, axes=(-2, -1))
    potw = jnp.roll(potw, shift=(-(SX // 2), -(SY // 2)), axis=(1, 2))
    fieldw = -jnp.clip(potw - 1e-8, 0.0, 1.0) * 10.0
    for i in range(C - 1):
        D = D.at[:, :, :, i].add(fieldw)

    return jnp.clip(state + D / T, 0.0, 1.0)


# ----------------------------------------------------------------------------
if __name__ == "__main__":
    SX, SY, C, NB_K, INIT_SIZE = 64, 128, 2, 10, 16

    key = jax.random.PRNGKey(0)
    keys = jax.random.split(key, 10)

    # Deterministic "sampled" update-rule parameters (shapes/ranges from
    # LeniaUpdateRuleSpace).  s is sampled in [0.05, 0.18] (inside the space);
    # extremely small s makes exp hypersensitive to f32 FFT roundoff and is a
    # precision concern of the f32 port, not of the kernel structure.
    R = 13.0                                                       # DiscreteSpace(n=25)
    T = 1.0 + 9.0 * jax.random.uniform(keys[0], (), jnp.float32)   # [1, 10]
    r = 0.2 + 0.8 * jax.random.uniform(keys[1], (NB_K,), jnp.float32)
    rk = jax.random.uniform(keys[2], (NB_K, 3), jnp.float32)
    b = jax.random.uniform(keys[3], (NB_K, 3), jnp.float32)
    w = 0.01 + 0.49 * jax.random.uniform(keys[4], (NB_K, 3), jnp.float32)
    m = 0.05 + 0.45 * jax.random.uniform(keys[5], (NB_K,), jnp.float32)
    s = 0.05 + 0.13 * jax.random.uniform(keys[6], (NB_K,), jnp.float32)
    h = jax.random.uniform(keys[7], (NB_K,), jnp.float32) / 3.0    # reset() divides h by 3

    # Kernels used by the Pallas path (circular half-roll folded in, exact +/-1).
    kernels_fft = compute_kernels_fft(SX, SY, R, r, rk, w, b, fold_roll=True)
    kernel_wall_fft = compute_kernel_wall_fft(SX, SY, fold_roll=True)

    # Initial state (generate_init_state analogue at small shapes):
    # creature patch in channel 0, obstacle wall in channel 1.
    init_patch = jax.random.uniform(keys[8], (INIT_SIZE, INIT_SIZE), jnp.float32)
    wall = (jax.random.uniform(keys[9], (SX, SY)) > 0.97).astype(jnp.float32)
    state = jnp.zeros((1, SX, SY, C), jnp.float32)
    state = state.at[0, 20:20 + INIT_SIZE, 40:40 + INIT_SIZE, 0].set(init_patch)
    state = state.at[0, :, :, 1].set(wall)

    out = lenia_forward(state, kernels_fft, kernel_wall_fft, m, s, h, T)
    out = jax.block_until_ready(out)

    # Independent reference: unshifted kernels + explicit post-irfft rolls.
    kernels_fft_ref = compute_kernels_fft(SX, SY, R, r, rk, w, b, fold_roll=False)
    kernel_wall_fft_ref = compute_kernel_wall_fft(SX, SY, fold_roll=False)
    ref = lenia_forward_ref(state, kernels_fft_ref, kernel_wall_fft_ref,
                            m, s, h, T)

    assert out.shape == state.shape and out.dtype == jnp.float32
    max_err = float(jnp.max(jnp.abs(out - ref)))
    assert bool(jnp.allclose(out, ref, atol=1e-3, rtol=1e-3)), max_err
    print("KERNEL_OK")
</pallas_src>

<mosaic_0001>
module attributes {stable_mosaic.version = 11 : i64} {
  func.func @kernel(%arg0: i32, %arg1: memref<10xf32, #tpu.memory_space<smem>>, %arg2: memref<10xf32, #tpu.memory_space<smem>>, %arg3: memref<10xf32, #tpu.memory_space<smem>>, %arg4: memref<2xf32, #tpu.memory_space<smem>>, %arg5: memref<11x16x128xf32, #tpu.memory_space<vmem>>, %arg6: memref<2x16x128xf32, #tpu.memory_space<vmem>>, %arg7: memref<2x16x128xf32, #tpu.memory_space<vmem>>) attributes {dimension_semantics = [#tpu.dimension_semantics<parallel>], iteration_bounds = array<i64: 4>, scalar_prefetch = 0 : i64, scratch_operands = 0 : i64, tpu.core_type = #tpu.core_type<tc>, window_params = [{transform_indices = @transform_0, window_bounds = array<i64: 10>}, {transform_indices = @transform_1, window_bounds = array<i64: 10>}, {transform_indices = @transform_2, window_bounds = array<i64: 10>}, {transform_indices = @transform_3, window_bounds = array<i64: 2>}, {transform_indices = @transform_4, window_bounds = array<i64: 11, 16, 128>}, {transform_indices = @transform_5, window_bounds = array<i64: 2, 16, 128>}, {transform_indices = @transform_6, window_bounds = array<i64: 2, 16, 128>}]} {
    %c0 = arith.constant 0 : index
    %0 = memref.load %arg4[%c0] : memref<2xf32, #tpu.memory_space<smem>>
    %c1 = arith.constant 1 : index
    %1 = memref.load %arg4[%c1] : memref<2xf32, #tpu.memory_space<smem>>
    %c0_0 = arith.constant 0 : index
    %c0_1 = arith.constant 0 : index
    %c0_2 = arith.constant 0 : index
    %2 = vector.load %arg5[%c0_0, %c0_1, %c0_2] : memref<11x16x128xf32, #tpu.memory_space<vmem>>, vector<1x16x128xf32>
    %3 = vector.shape_cast %2 : vector<1x16x128xf32> to vector<16x128xf32>
    %c0_3 = arith.constant 0 : index
    %4 = memref.load %arg1[%c0_3] : memref<10xf32, #tpu.memory_space<smem>>
    %5 = vector.broadcast %4 : f32 to vector<16x128xf32>
    %6 = arith.subf %3, %5 : vector<16x128xf32>
    %c0_4 = arith.constant 0 : index
    %7 = memref.load %arg3[%c0_4] : memref<10xf32, #tpu.memory_space<smem>>
    %8 = arith.mulf %6, %6 : vector<16x128xf32>
    %c0_5 = arith.constant 0 : index
    %9 = memref.load %arg2[%c0_5] : memref<10xf32, #tpu.memory_space<smem>>
    %10 = vector.broadcast %9 : f32 to vector<16x128xf32>
    %11 = arith.mulf %8, %10 : vector<16x128xf32>
    %12 = math.exp %11 : vector<16x128xf32>
    %13 = vector.broadcast %7 : f32 to vector<16x128xf32>
    %14 = arith.mulf %13, %12 : vector<16x128xf32>
    %c1_6 = arith.constant 1 : index
    %c0_7 = arith.constant 0 : index
    %c0_8 = arith.constant 0 : index
    %15 = vector.load %arg5[%c1_6, %c0_7, %c0_8] : memref<11x16x128xf32, #tpu.memory_space<vmem>>, vector<1x16x128xf32>
    %16 = vector.shape_cast %15 : vector<1x16x128xf32> to vector<16x128xf32>
    %c1_9 = arith.constant 1 : index
    %17 = memref.load %arg1[%c1_9] : memref<10xf32, #tpu.memory_space<smem>>
    %18 = vector.broadcast %17 : f32 to vector<16x128xf32>
    %19 = arith.subf %16, %18 : vector<16x128xf32>
    %c1_10 = arith.constant 1 : index
    %20 = memref.load %arg3[%c1_10] : memref<10xf32, #tpu.memory_space<smem>>
    %21 = arith.mulf %19, %19 : vector<16x128xf32>
    %c1_11 = arith.constant 1 : index
    %22 = memref.load %arg2[%c1_11] : memref<10xf32, #tpu.memory_space<smem>>
    %23 = vector.broadcast %22 : f32 to vector<16x128xf32>
    %24 = arith.mulf %21, %23 : vector<16x128xf32>
    %25 = math.exp %24 : vector<16x128xf32>
    %26 = vector.broadcast %20 : f32 to vector<16x128xf32>
    %27 = arith.mulf %26, %25 : vector<16x128xf32>
    %28 = arith.addf %14, %27 : vector<16x128xf32>
    %c2 = arith.constant 2 : index
    %c0_12 = arith.constant 0 : index
    %c0_13 = arith.constant 0 : index
    %29 = vector.load %arg5[%c2, %c0_12, %c0_13] : memref<11x16x128xf32, #tpu.memory_space<vmem>>, vector<1x16x128xf32>
    %30 = vector.shape_cast %29 : vector<1x16x128xf32> to vector<16x128xf32>
    %c2_14 = arith.constant 2 : index
    %31 = memref.load %arg1[%c2_14] : memref<10xf32, #tpu.memory_space<smem>>
    %32 = vector.broadcast %31 : f32 to vector<16x128xf32>
    %33 = arith.subf %30, %32 : vector<16x128xf32>
    %c2_15 = arith.constant 2 : index
    %34 = memref.load %arg3[%c2_15] : memref<10xf32, #tpu.memory_space<smem>>
    %35 = arith.mulf %33, %33 : vector<16x128xf32>
    %c2_16 = arith.constant 2 : index
    %36 = memref.load %arg2[%c2_16] : memref<10xf32, #tpu.memory_space<smem>>
    %37 = vector.broadcast %36 : f32 to vector<16x128xf32>
    %38 = arith.mulf %35, %37 : vector<16x128xf32>
    %39 = math.exp %38 : vector<16x128xf32>
    %40 = vector.broadcast %34 : f32 to vector<16x128xf32>
    %41 = arith.mulf %40, %39 : vector<16x128xf32>
    %42 = arith.addf %28, %41 : vector<16x128xf32>
    %c3 = arith.constant 3 : index
    %c0_17 = arith.constant 0 : index
    %c0_18 = arith.constant 0 : index
    %43 = vector.load %arg5[%c3, %c0_17, %c0_18] : memref<11x16x128xf32, #tpu.memory_space<vmem>>, vector<1x16x128xf32>
    %44 = vector.shape_cast %43 : vector<1x16x128xf32> to vector<16x128xf32>
    %c3_19 = arith.constant 3 : index
    %45 = memref.load %arg1[%c3_19] : memref<10xf32, #tpu.memory_space<smem>>
    %46 = vector.broadcast %45 : f32 to vector<16x128xf32>
    %47 = arith.subf %44, %46 : vector<16x128xf32>
    %c3_20 = arith.constant 3 : index
    %48 = memref.load %arg3[%c3_20] : memref<10xf32, #tpu.memory_space<smem>>
    %49 = arith.mulf %47, %47 : vector<16x128xf32>
    %c3_21 = arith.constant 3 : index
    %50 = memref.load %arg2[%c3_21] : memref<10xf32, #tpu.memory_space<smem>>
    %51 = vector.broadcast %50 : f32 to vector<16x128xf32>
    %52 = arith.mulf %49, %51 : vector<16x128xf32>
    %53 = math.exp %52 : vector<16x128xf32>
    %54 = vector.broadcast %48 : f32 to vector<16x128xf32>
    %55 = arith.mulf %54, %53 : vector<16x128xf32>
    %56 = arith.addf %42, %55 : vector<16x128xf32>
    %c4 = arith.constant 4 : index
    %c0_22 = arith.constant 0 : index
    %c0_23 = arith.constant 0 : index
    %57 = vector.load %arg5[%c4, %c0_22, %c0_23] : memref<11x16x128xf32, #tpu.memory_space<vmem>>, vector<1x16x128xf32>
    %58 = vector.shape_cast %57 : vector<1x16x128xf32> to vector<16x128xf32>
    %c4_24 = arith.constant 4 : index
    %59 = memref.load %arg1[%c4_24] : memref<10xf32, #tpu.memory_space<smem>>
    %60 = vector.broadcast %59 : f32 to vector<16x128xf32>
    %61 = arith.subf %58, %60 : vector<16x128xf32>
    %c4_25 = arith.constant 4 : index
    %62 = memref.load %arg3[%c4_25] : memref<10xf32, #tpu.memory_space<smem>>
    %63 = arith.mulf %61, %61 : vector<16x128xf32>
    %c4_26 = arith.constant 4 : index
    %64 = memref.load %arg2[%c4_26] : memref<10xf32, #tpu.memory_space<smem>>
    %65 = vector.broadcast %64 : f32 to vector<16x128xf32>
    %66 = arith.mulf %63, %65 : vector<16x128xf32>
    %67 = math.exp %66 : vector<16x128xf32>
    %68 = vector.broadcast %62 : f32 to vector<16x128xf32>
    %69 = arith.mulf %68, %67 : vector<16x128xf32>
    %70 = arith.addf %56, %69 : vector<16x128xf32>
    %c5 = arith.constant 5 : index
    %c0_27 = arith.constant 0 : index
    %c0_28 = arith.constant 0 : index
    %71 = vector.load %arg5[%c5, %c0_27, %c0_28] : memref<11x16x128xf32, #tpu.memory_space<vmem>>, vector<1x16x128xf32>
    %72 = vector.shape_cast %71 : vector<1x16x128xf32> to vector<16x128xf32>
    %c5_29 = arith.constant 5 : index
    %73 = memref.load %arg1[%c5_29] : memref<10xf32, #tpu.memory_space<smem>>
    %74 = vector.broadcast %73 : f32 to vector<16x128xf32>
    %75 = arith.subf %72, %74 : vector<16x128xf32>
    %c5_30 = arith.constant 5 : index
    %76 = memref.load %arg3[%c5_30] : memref<10xf32, #tpu.memory_space<smem>>
    %77 = arith.mulf %75, %75 : vector<16x128xf32>
    %c5_31 = arith.constant 5 : index
    %78 = memref.load %arg2[%c5_31] : memref<10xf32, #tpu.memory_space<smem>>
    %79 = vector.broadcast %78 : f32 to vector<16x128xf32>
    %80 = arith.mulf %77, %79 : vector<16x128xf32>
    %81 = math.exp %80 : vector<16x128xf32>
    %82 = vector.broadcast %76 : f32 to vector<16x128xf32>
    %83 = arith.mulf %82, %81 : vector<16x128xf32>
    %84 = arith.addf %70, %83 : vector<16x128xf32>
    %c6 = arith.constant 6 : index
    %c0_32 = arith.constant 0 : index
    %c0_33 = arith.constant 0 : index
    %85 = vector.load %arg5[%c6, %c0_32, %c0_33] : memref<11x16x128xf32, #tpu.memory_space<vmem>>, vector<1x16x128xf32>
    %86 = vector.shape_cast %85 : vector<1x16x128xf32> to vector<16x128xf32>
    %c6_34 = arith.constant 6 : index
    %87 = memref.load %arg1[%c6_34] : memref<10xf32, #tpu.memory_space<smem>>
    %88 = vector.broadcast %87 : f32 to vector<16x128xf32>
    %89 = arith.subf %86, %88 : vector<16x128xf32>
    %c6_35 = arith.constant 6 : index
    %90 = memref.load %arg3[%c6_35] : memref<10xf32, #tpu.memory_space<smem>>
    %91 = arith.mulf %89, %89 : vector<16x128xf32>
    %c6_36 = arith.constant 6 : index
    %92 = memref.load %arg2[%c6_36] : memref<10xf32, #tpu.memory_space<smem>>
    %93 = vector.broadcast %92 : f32 to vector<16x128xf32>
    %94 = arith.mulf %91, %93 : vector<16x128xf32>
    %95 = math.exp %94 : vector<16x128xf32>
    %96 = vector.broadcast %90 : f32 to vector<16x128xf32>
    %97 = arith.mulf %96, %95 : vector<16x128xf32>
    %98 = arith.addf %84, %97 : vector<16x128xf32>
    %c7 = arith.constant 7 : index
    %c0_37 = arith.constant 0 : index
    %c0_38 = arith.constant 0 : index
    %99 = vector.load %arg5[%c7, %c0_37, %c0_38] : memref<11x16x128xf32, #tpu.memory_space<vmem>>, vector<1x16x128xf32>
    %100 = vector.shape_cast %99 : vector<1x16x128xf32> to vector<16x128xf32>
    %c7_39 = arith.constant 7 : index
    %101 = memref.load %arg1[%c7_39] : memref<10xf32, #tpu.memory_space<smem>>
    %102 = vector.broadcast %101 : f32 to vector<16x128xf32>
    %103 = arith.subf %100, %102 : vector<16x128xf32>
    %c7_40 = arith.constant 7 : index
    %104 = memref.load %arg3[%c7_40] : memref<10xf32, #tpu.memory_space<smem>>
    %105 = arith.mulf %103, %103 : vector<16x128xf32>
    %c7_41 = arith.constant 7 : index
    %106 = memref.load %arg2[%c7_41] : memref<10xf32, #tpu.memory_space<smem>>
    %107 = vector.broadcast %106 : f32 to vector<16x128xf32>
    %108 = arith.mulf %105, %107 : vector<16x128xf32>
    %109 = math.exp %108 : vector<16x128xf32>
    %110 = vector.broadcast %104 : f32 to vector<16x128xf32>
    %111 = arith.mulf %110, %109 : vector<16x128xf32>
    %112 = arith.addf %98, %111 : vector<16x128xf32>
    %c8 = arith.constant 8 : index
    %c0_42 = arith.constant 0 : index
    %c0_43 = arith.constant 0 : index
    %113 = vector.load %arg5[%c8, %c0_42, %c0_43] : memref<11x16x128xf32, #tpu.memory_space<vmem>>, vector<1x16x128xf32>
    %114 = vector.shape_cast %113 : vector<1x16x128xf32> to vector<16x128xf32>
    %c8_44 = arith.constant 8 : index
    %115 = memref.load %arg1[%c8_44] : memref<10xf32, #tpu.memory_space<smem>>
    %116 = vector.broadcast %115 : f32 to vector<16x128xf32>
    %117 = arith.subf %114, %116 : vector<16x128xf32>
    %c8_45 = arith.constant 8 : index
    %118 = memref.load %arg3[%c8_45] : memref<10xf32, #tpu.memory_space<smem>>
    %119 = arith.mulf %117, %117 : vector<16x128xf32>
    %c8_46 = arith.constant 8 : index
    %120 = memref.load %arg2[%c8_46] : memref<10xf32, #tpu.memory_space<smem>>
    %121 = vector.broadcast %120 : f32 to vector<16x128xf32>
    %122 = arith.mulf %119, %121 : vector<16x128xf32>
    %123 = math.exp %122 : vector<16x128xf32>
    %124 = vector.broadcast %118 : f32 to vector<16x128xf32>
    %125 = arith.mulf %124, %123 : vector<16x128xf32>
    %126 = arith.addf %112, %125 : vector<16x128xf32>
    %c9 = arith.constant 9 : index
    %c0_47 = arith.constant 0 : index
    %c0_48 = arith.constant 0 : index
    %127 = vector.load %arg5[%c9, %c0_47, %c0_48] : memref<11x16x128xf32, #tpu.memory_space<vmem>>, vector<1x16x128xf32>
    %128 = vector.shape_cast %127 : vector<1x16x128xf32> to vector<16x128xf32>
    %c9_49 = arith.constant 9 : index
    %129 = memref.load %arg1[%c9_49] : memref<10xf32, #tpu.memory_space<smem>>
    %130 = vector.broadcast %129 : f32 to vector<16x128xf32>
    %131 = arith.subf %128, %130 : vector<16x128xf32>
    %c9_50 = arith.constant 9 : index
    %132 = memref.load %arg3[%c9_50] : memref<10xf32, #tpu.memory_space<smem>>
    %133 = arith.mulf %131, %131 : vector<16x128xf32>
    %c9_51 = arith.constant 9 : index
    %134 = memref.load %arg2[%c9_51] : memref<10xf32, #tpu.memory_space<smem>>
    %135 = vector.broadcast %134 : f32 to vector<16x128xf32>
    %136 = arith.mulf %133, %135 : vector<16x128xf32>
    %137 = math.exp %136 : vector<16x128xf32>
    %138 = vector.broadcast %132 : f32 to vector<16x128xf32>
    %139 = arith.mulf %138, %137 : vector<16x128xf32>
    %140 = arith.addf %126, %139 : vector<16x128xf32>
    %141 = vector.broadcast %1 : f32 to vector<16x128xf32>
    %142 = arith.subf %140, %141 : vector<16x128xf32>
    %c10 = arith.constant 10 : index
    %c0_52 = arith.constant 0 : index
    %c0_53 = arith.constant 0 : index
    %143 = vector.load %arg5[%c10, %c0_52, %c0_53] : memref<11x16x128xf32, #tpu.memory_space<vmem>>, vector<1x16x128xf32>
    %144 = vector.shape_cast %143 : vector<1x16x128xf32> to vector<16x128xf32>
    %cst = arith.constant 9.99999993E-9 : f32
    %145 = vector.broadcast %cst : f32 to vector<16x128xf32>
    %146 = arith.subf %144, %145 : vector<16x128xf32>
    %cst_54 = arith.constant 0.000000e+00 : f32
    %cst_55 = arith.constant 1.000000e+00 : f32
    %147 = vector.broadcast %cst_54 : f32 to vector<16x128xf32>
    %148 = arith.maximumf %147, %146 : vector<16x128xf32>
    %149 = vector.broadcast %cst_55 : f32 to vector<16x128xf32>
    %150 = arith.minimumf %149, %148 : vector<16x128xf32>
    %cst_56 = arith.constant -1.000000e+01 : f32
    %151 = vector.broadcast %cst_56 : f32 to vector<16x128xf32>
    %152 = arith.mulf %150, %151 : vector<16x128xf32>
    %c0_57 = arith.constant 0 : index
    %c0_58 = arith.constant 0 : index
    %c0_59 = arith.constant 0 : index
    %153 = vector.load %arg6[%c0_57, %c0_58, %c0_59] : memref<2x16x128xf32, #tpu.memory_space<vmem>>, vector<1x16x128xf32>
    %154 = vector.shape_cast %153 : vector<1x16x128xf32> to vector<16x128xf32>
    %155 = arith.addf %142, %152 : vector<16x128xf32>
    %156 = vector.broadcast %0 : f32 to vector<16x128xf32>
    %157 = arith.mulf %156, %155 : vector<16x128xf32>
    %158 = arith.addf %154, %157 : vector<16x128xf32>
    %cst_60 = arith.constant 0.000000e+00 : f32
    %cst_61 = arith.constant 1.000000e+00 : f32
    %159 = vector.broadcast %cst_60 : f32 to vector<16x128xf32>
    %160 = arith.maximumf %159, %158 : vector<16x128xf32>
    %161 = vector.broadcast %cst_61 : f32 to vector<16x128xf32>
    %162 = arith.minimumf %161, %160 : vector<16x128xf32>
    %c0_62 = arith.constant 0 : index
    %c0_63 = arith.constant 0 : index
    %c0_64 = arith.constant 0 : index
    %163 = vector.load %arg7[%c0_62, %c0_63, %c0_64] : memref<2x16x128xf32, #tpu.memory_space<vmem>>, vector<1x16x128xf32>
    %164 = vector.shape_cast %163 : vector<1x16x128xf32> to vector<16x128xf32>
    %165 = vector.shape_cast %162 : vector<16x128xf32> to vector<1x16x128xf32>
    tpu.vector_store %arg7[%c0_62, %c0_63, %c0_64], %165 {strides = array<i32>} : memref<2x16x128xf32, #tpu.memory_space<vmem>>, vector<1x16x128xf32>,
    %c1_65 = arith.constant 1 : index
    %c0_66 = arith.constant 0 : index
    %c0_67 = arith.constant 0 : index
    %166 = vector.load %arg6[%c1_65, %c0_66, %c0_67] : memref<2x16x128xf32, #tpu.memory_space<vmem>>, vector<1x16x128xf32>
    %167 = vector.shape_cast %166 : vector<1x16x128xf32> to vector<16x128xf32>
    %cst_68 = arith.constant 0.000000e+00 : f32
    %cst_69 = arith.constant 1.000000e+00 : f32
    %168 = vector.broadcast %cst_68 : f32 to vector<16x128xf32>
    %169 = arith.maximumf %168, %167 : vector<16x128xf32>
    %170 = vector.broadcast %cst_69 : f32 to vector<16x128xf32>
    %171 = arith.minimumf %170, %169 : vector<16x128xf32>
    %c1_70 = arith.constant 1 : index
    %c0_71 = arith.constant 0 : index
    %c0_72 = arith.constant 0 : index
    %172 = vector.load %arg7[%c1_70, %c0_71, %c0_72] : memref<2x16x128xf32, #tpu.memory_space<vmem>>, vector<1x16x128xf32>
    %173 = vector.shape_cast %172 : vector<1x16x128xf32> to vector<16x128xf32>
    %174 = vector.shape_cast %171 : vector<16x128xf32> to vector<1x16x128xf32>
    tpu.vector_store %arg7[%c1_70, %c0_71, %c0_72], %174 {strides = array<i32>} : memref<2x16x128xf32, #tpu.memory_space<vmem>>, vector<1x16x128xf32>,
    return
  }
  func.func @transform_0(%arg0: i32) -> i32 {
    %c0_i32 = arith.constant 0 : i32
    %c0_i32_0 = arith.constant 0 : i32
    return %c0_i32 : i32
  }
  func.func @transform_1(%arg0: i32) -> i32 {
    %c0_i32 = arith.constant 0 : i32
    %c0_i32_0 = arith.constant 0 : i32
    return %c0_i32 : i32
  }
  func.func @transform_2(%arg0: i32) -> i32 {
    %c0_i32 = arith.constant 0 : i32
    %c0_i32_0 = arith.constant 0 : i32
    return %c0_i32 : i32
  }
  func.func @transform_3(%arg0: i32) -> i32 {
    %c0_i32 = arith.constant 0 : i32
    %c0_i32_0 = arith.constant 0 : i32
    return %c0_i32 : i32
  }
  func.func @transform_4(%arg0: i32) -> (i32, i32, i32) {
    %c0_i32 = arith.constant 0 : i32
    %c0_i32_0 = arith.constant 0 : i32
    %c0_i32_1 = arith.constant 0 : i32
    return %c0_i32, %arg0, %c0_i32_0 : i32, i32, i32
  }
  func.func @transform_5(%arg0: i32) -> (i32, i32, i32) {
    %c0_i32 = arith.constant 0 : i32
    %c0_i32_0 = arith.constant 0 : i32
    %c0_i32_1 = arith.constant 0 : i32
    return %c0_i32, %arg0, %c0_i32_0 : i32, i32, i32
  }
  func.func @transform_6(%arg0: i32) -> (i32, i32, i32) {
    %c0_i32 = arith.constant 0 : i32
    %c0_i32_0 = arith.constant 0 : i32
    %c0_i32_1 = arith.constant 0 : i32
    return %c0_i32, %arg0, %c0_i32_0 : i32, i32, i32
  }
}

</mosaic_0001>

<llo_original>
// kernel: tpu_custom_call.1
$region0: #{tpu_custom_call.1}
  #allocation0 [shape = 'u32[]', space=smem, size = 0x4, offset = 0x4, fixed_abs, tag = 'smem constant byte address 0x4 - core index']
  #allocation1 [shape = 'u32[72,128]{1,0:T(1,128)}', space=vmem, size = 0x9000, scoped, tag = 'internal scratch']
  #allocation16 [shape = 's32[]', space=sflag, size = 0x4, offset = 0, fixed_abs, tag = 'sflag constant byte address 0x0 - dummy sync flag']
  #allocation18 [shape = 's32[]', space=sflag, size = 0x4, offset = 0, fixed_abs, tag = 'sflag constant byte address 0x0 - dummy sync flag']
  #allocation20 [shape = 's32[]', space=sflag, size = 0x4, offset = 0, fixed_abs, tag = 'sflag constant byte address 0x0 - dummy sync flag']
  %s0 = inlined_call_operand.hbm [shape: f32[10], index: 0, kind: input, shape index: {}]
  %s1 = inlined_call_operand.hbm [shape: f32[10], index: 1, kind: input, shape index: {}]
  %s2 = inlined_call_operand.vmem [shape: f32[10], index: 2, kind: input, shape index: {}]
  %s3 = inlined_call_operand.vmem [shape: f32[2], index: 3, kind: input, shape index: {}]
  %s4 = inlined_call_operand.hbm [shape: f32[11,64,128], index: 4, kind: input, shape index: {}]
  %s5 = inlined_call_operand.hbm [shape: f32[2,64,128], index: 5, kind: input, shape index: {}]
  %s6 = inlined_call_operand.hbm [shape: f32[2,64,128], index: 6, kind: output, shape index: {}]
  %s7 = sld [smem:[#allocation0]]
  $region81: #{tpu_custom_call.1} parent=0
    _
  %s9 = ssub.s32 1, %s7
  %s10 = scalar_select 0, %s9, %s7
  $region1: #{tpu_custom_call.1} parent=0
    #allocation2 [shape = 'u8[512]{0}', space=smem, size = 0x200, scoped, tag = 'input window, operand 0, single buffered']
    #allocation3 [shape = 's32[2]{0}', space=sflag, size = 0x8, scoped, tag = 'scoped memory for tpu_custom_call.1']
    #allocation4 [shape = 's32[2]{0}', space=sflag, size = 0x8, scoped, tag = 'scoped memory for tpu_custom_call.1']
    #allocation5 [shape = 's32[2]{0}', space=sflag, size = 0x8, scoped, tag = 'scoped memory for tpu_custom_call.1']
    #allocation6 [shape = 's32[2]{0}', space=sflag, size = 0x8, scoped, tag = 'scoped memory for tpu_custom_call.1']
    #allocation7 [shape = 'u8[512]{0}', space=smem, size = 0x200, scoped, tag = 'input window, operand 1, single buffered']
    #allocation8 [shape = 's32[1]{0}', space=sflag, size = 0x4, scoped, tag = 'scoped memory for tpu_custom_call.1']
    #allocation9 [shape = 'u8[512]{0}', space=smem, size = 0x200, scoped, tag = 'input window, operand 2, single buffered']
    #allocation10 [shape = 'u8[512]{0}', space=smem, size = 0x200, scoped, tag = 'input window, operand 3, single buffered']
    #allocation11 [shape = 's32[1]{0}', space=sflag, size = 0x4, scoped, tag = 'scoped memory for tpu_custom_call.1']
    #allocation12 [shape = 'u8[180224]{0}', space=vmem, size = 0x2c000, scoped, tag = 'input window, operand 4']
    #allocation13 [shape = 'u8[32768]{0}', space=vmem, size = 0x8000, scoped, tag = 'input window, operand 5']
    #allocation14 [shape = 's32[2]{0}', space=sflag, size = 0x8, scoped, tag = 'scoped memory for tpu_custom_call.1']
    #allocation15 [shape = 'u8[32768]{0}', space=vmem, size = 0x8000, scoped, tag = 'output window, operand 0']
    %11 = vsyncpa [#allocation5], 0
    %12 = vsyncpa [#allocation8], 0
    %13 = vsyncpa [#allocation6], 0
    %14 = vsyncpa [#allocation11], 0
    %15 = vsyncpa [#allocation3], 0
    %s16 = scalar_lea.sflag [#allocation3], 1
    %17 = vsyncpa %s16, 0
    %18 = vsyncpa [#allocation14], 0
    %s19 = scalar_lea.sflag [#allocation14], 1
    %20 = vsyncpa %s19, 0
    %21 = vsyncpa [#allocation4], 0
    %s22 = scalar_lea.sflag [#allocation4], 1
    %23 = vsyncpa %s22, 0
    loop: start=0, step=1, limit=6
    $region2: #{tpu_custom_call.1} parent=1 // loop_pre_header
      _
    $region3: #{tpu_custom_call.1} parent=1 // loop_header
      %s25 = sphi 0, %s29
      %p26 = scmp.ge.s32.totalorder %s25, 6
      %s33 = sphi 0, %s33
      %s35 = sphi 0, %s33
      %s36 = sphi 0, %s35
      %s50 = sphi 0, %s36
      %s54 = sphi 0, %s54
      %s56 = sphi 0, %s54
      %s57 = sphi 0, %s56
      %s71 = sphi 0, %s57
      %s75 = sphi 0, %s75
      %s77 = sphi 0, %s75
      %s78 = sphi 0, %s77
      %s92 = sphi 0, %s78
      %s96 = sphi 0, %s96
      %s98 = sphi 0, %s96
      %s99 = sphi 0, %s98
      %s113 = sphi 0, %s99
      %s119 = sphi 0, %s121
      %s122 = sphi 0, %s119
      %s123 = sphi 0, %s122
      %s139 = sphi 0, %s123
      %s145 = sphi 0, %s147
      %s148 = sphi 0, %s145
      %s149 = sphi 0, %s148
      %s165 = sphi 0, %s149
      %s171 = sphi 0, %s173
      %s174 = sphi 0, %s171
      %s175 = sphi 0, %s174
      %s191 = sphi 0, %s175
    $region4: #{tpu_custom_call.1} parent=1 // loop_header_branch
      %28 = sbr.rel (%p26) target = $region8
    $region5: #{tpu_custom_call.1} parent=1 // loop_body
      %s30 = ssub.s32 %s25, 1
      %s31 = ssub.s32 %s25, 2
      %s32 = sadd.s32 %s25, 1
      %s34 = sadd.s32 %s33, 1
      %p37 = scmp.eq.s32.totalorder %s25, 3
      %p38 = scmp.ne.s32.totalorder %s33, %s35
      %p39 = scmp.eq.s32.totalorder %s25, 0
      %p40 = por %p38, %p39
      %p41 = scmp.ne.s32.totalorder %s33, %s35
      %p42 = scmp.eq.s32.totalorder %s30, 3
      %p43 = por %p41, %p42
      %p44 = scmp.ne.s32.totalorder %s35, %s36
      %p45 = scmp.eq.s32.totalorder %s30, 0
      %p46 = por %p44, %p45
      %p47 = scmp.ne.s32.totalorder %s35, %s36
      %p48 = scmp.eq.s32.totalorder %s31, 3
      %p49 = por %p47, %p48
      %p51 = scmp.ne.s32.totalorder %s36, %s50
      %p52 = scmp.eq.s32.totalorder %s31, 0
      %p53 = por %p51, %p52
      %s55 = sadd.s32 %s54, 1
      %p58 = scmp.eq.s32.totalorder %s25, 3
      %p59 = scmp.ne.s32.totalorder %s54, %s56
      %p60 = scmp.eq.s32.totalorder %s25, 0
      %p61 = por %p59, %p60
      %p62 = scmp.ne.s32.totalorder %s54, %s56
      %p63 = scmp.eq.s32.totalorder %s30, 3
      %p64 = por %p62, %p63
      %p65 = scmp.ne.s32.totalorder %s56, %s57
      %p66 = scmp.eq.s32.totalorder %s30, 0
      %p67 = por %p65, %p66
      %p68 = scmp.ne.s32.totalorder %s56, %s57
      %p69 = scmp.eq.s32.totalorder %s31, 3
      %p70 = por %p68, %p69
      %p72 = scmp.ne.s32.totalorder %s57, %s71
      %p73 = scmp.eq.s32.totalorder %s31, 0
      %p74 = por %p72, %p73
      %s76 = sadd.s32 %s75, 1
      %p79 = scmp.eq.s32.totalorder %s25, 3
      %p80 = scmp.ne.s32.totalorder %s75, %s77
      %p81 = scmp.eq.s32.totalorder %s25, 0
      %p82 = por %p80, %p81
      %p83 = scmp.ne.s32.totalorder %s75, %s77
      %p84 = scmp.eq.s32.totalorder %s30, 3
      %p85 = por %p83, %p84
      %p86 = scmp.ne.s32.totalorder %s77, %s78
      %p87 = scmp.eq.s32.totalorder %s30, 0
      %p88 = por %p86, %p87
      %p89 = scmp.ne.s32.totalorder %s77, %s78
      %p90 = scmp.eq.s32.totalorder %s31, 3
      %p91 = por %p89, %p90
      %p93 = scmp.ne.s32.totalorder %s78, %s92
      %p94 = scmp.eq.s32.totalorder %s31, 0
      %p95 = por %p93, %p94
      %s97 = sadd.s32 %s96, 1
      %p100 = scmp.eq.s32.totalorder %s25, 3
      %p101 = scmp.ne.s32.totalorder %s96, %s98
      %p102 = scmp.eq.s32.totalorder %s25, 0
      %p103 = por %p101, %p102
      %p104 = scmp.ne.s32.totalorder %s96, %s98
      %p105 = scmp.eq.s32.totalorder %s30, 3
      %p106 = por %p104, %p105
      %p107 = scmp.ne.s32.totalorder %s98, %s99
      %p108 = scmp.eq.s32.totalorder %s30, 0
      %p109 = por %p107, %p108
      %p110 = scmp.ne.s32.totalorder %s98, %s99
      %p111 = scmp.eq.s32.totalorder %s31, 3
      %p112 = por %p110, %p111
      %p114 = scmp.ne.s32.totalorder %s99, %s113
      %p115 = scmp.eq.s32.totalorder %s31, 0
      %p116 = por %p114, %p115
      %s117 = ssub.s32 %s25, %s32
      %p118 = scmp.eq.s32.totalorder %s117, 0
      %s120 = sadd.s32 %s119, 1
      %s121 = scalar_select %p118, %s119, %s120
      %p124 = pneg %p118
      %p125 = scmp.eq.s32.totalorder %s25, 3
      %p126 = por %p124, %p125
      %p127 = scmp.ne.s32.totalorder %s119, %s122
      %p128 = scmp.eq.s32.totalorder %s25, 0
      %p129 = por %p127, %p128
      %p130 = scmp.ne.s32.totalorder %s119, %s122
      %p131 = scmp.eq.s32.totalorder %s30, 3
      %p132 = por %p130, %p131
      %p133 = scmp.ne.s32.totalorder %s122, %s123
      %p134 = scmp.eq.s32.totalorder %s30, 0
      %p135 = por %p133, %p134
      %p136 = scmp.ne.s32.totalorder %s122, %s123
      %p137 = scmp.eq.s32.totalorder %s31, 3
      %p138 = por %p136, %p137
      %p140 = scmp.ne.s32.totalorder %s123, %s139
      %p141 = scmp.eq.s32.totalorder %s31, 0
      %p142 = por %p140, %p141
      %s143 = ssub.s32 %s25, %s32
      %p144 = scmp.eq.s32.totalorder %s143, 0
      %s146 = sadd.s32 %s145, 1
      %s147 = scalar_select %p144, %s145, %s146
      %p150 = pneg %p144
      %p151 = scmp.eq.s32.totalorder %s25, 3
      %p152 = por %p150, %p151
      %p153 = scmp.ne.s32.totalorder %s145, %s148
      %p154 = scmp.eq.s32.totalorder %s25, 0
      %p155 = por %p153, %p154
      %p156 = scmp.ne.s32.totalorder %s145, %s148
      %p157 = scmp.eq.s32.totalorder %s30, 3
      %p158 = por %p156, %p157
      %p159 = scmp.ne.s32.totalorder %s148, %s149
      %p160 = scmp.eq.s32.totalorder %s30, 0
      %p161 = por %p159, %p160
      %p162 = scmp.ne.s32.totalorder %s148, %s149
      %p163 = scmp.eq.s32.totalorder %s31, 3
      %p164 = por %p162, %p163
      %p166 = scmp.ne.s32.totalorder %s149, %s165
      %p167 = scmp.eq.s32.totalorder %s31, 0
      %p168 = por %p166, %p167
      %s169 = ssub.s32 %s25, %s32
      %p170 = scmp.eq.s32.totalorder %s169, 0
      %s172 = sadd.s32 %s171, 1
      %s173 = scalar_select %p170, %s171, %s172
      %p176 = pneg %p170
      %p177 = scmp.eq.s32.totalorder %s25, 3
      %p178 = por %p176, %p177
      %p179 = scmp.ne.s32.totalorder %s171, %s174
      %p180 = scmp.eq.s32.totalorder %s25, 0
      %p181 = por %p179, %p180
      %p182 = scmp.ne.s32.totalorder %s171, %s174
      %p183 = scmp.eq.s32.totalorder %s30, 3
      %p184 = por %p182, %p183
      %p185 = scmp.ne.s32.totalorder %s174, %s175
      %p186 = scmp.eq.s32.totalorder %s30, 0
      %p187 = por %p185, %p186
      %p188 = scmp.ne.s32.totalorder %s174, %s175
      %p189 = scmp.eq.s32.totalorder %s31, 3
      %p190 = por %p188, %p189
      %p192 = scmp.ne.s32.totalorder %s175, %s191
      %p193 = scmp.eq.s32.totalorder %s31, 0
      %p194 = por %p192, %p193
      %p195 = scmp.le.s32.totalorder 1, %s25
      %p196 = scmp.lt.s32.totalorder %s25, 5
      %p197 = pnand %p195, %p196
      %p198 = pneg %p197
      // Predicated region
      $region9: #{tpu_custom_call.1} parent=5 // pred_check
        _
      $region10: #{tpu_custom_call.1} parent=5 // pred_check_branch
        %200 = sbr.rel (%p197) target = $region12
      $region11: #{tpu_custom_call.1} parent=5 // pred_region
        %s201 = ssub.s32 %s25, 1
        // Predicated region
        $region13: #{tpu_custom_call.1} parent=11 // pred_check
          %p202 = pneg %p46
        $region14: #{tpu_custom_call.1} parent=11 // pred_check_branch
          %204 = sbr.rel (%p202) target = $region16
        $region15: #{tpu_custom_call.1} parent=11 // pred_region
          %206 = vsyncadd [#allocation5], 0
          %s208 = sshll.u32 %s0, 4
          %s209 = int_to_ptr.hbm [resolvable:$true] %s208
          %211 = dma.hbm_to_smem %s209, 16, [#allocation2], [#allocation5]
        $region16: #{tpu_custom_call.1} parent=11 // pred_fallthru
          _
        // Predicated region
        $region17: #{tpu_custom_call.1} parent=11 // pred_check
          %p212 = pneg %p67
        $region18: #{tpu_custom_call.1} parent=11 // pred_check_branch
          %214 = sbr.rel (%p212) target = $region20
        $region19: #{tpu_custom_call.1} parent=11 // pred_region
          %216 = vsyncadd [#allocation8], 0
          %s218 = sshll.u32 %s1, 4
          %s219 = int_to_ptr.hbm [resolvable:$true] %s218
          %221 = dma.hbm_to_smem %s219, 16, [#allocation7], [#allocation8]
        $region20: #{tpu_custom_call.1} parent=11 // pred_fallthru
          _
        // Predicated region
        $region21: #{tpu_custom_call.1} parent=11 // pred_check
          %p222 = pneg %p88
        $region22: #{tpu_custom_call.1} parent=11 // pred_check_branch
          %224 = sbr.rel (%p222) target = $region24
        $region23: #{tpu_custom_call.1} parent=11 // pred_region
          %226 = vsyncadd [#allocation6], 0
          %s228 = sshll.u32 %s2, 4
          %s229 = int_to_ptr.vmem [resolvable:$true] %s228
          %231 = dma.vmem_to_smem %s229, 16, [#allocation9], [#allocation6]
        $region24: #{tpu_custom_call.1} parent=11 // pred_fallthru
          _
        // Predicated region
        $region25: #{tpu_custom_call.1} parent=11 // pred_check
          %p232 = pneg %p109
        $region26: #{tpu_custom_call.1} parent=11 // pred_check_branch
          %234 = sbr.rel (%p232) target = $region28
        $region27: #{tpu_custom_call.1} parent=11 // pred_region
          %236 = vsyncadd [#allocation11], 0
          %s238 = sshll.u32 %s3, 4
          %s239 = int_to_ptr.vmem [resolvable:$true] %s238
          %241 = dma.vmem_to_smem %s239, 16, [#allocation10], [#allocation11]
        $region28: #{tpu_custom_call.1} parent=11 // pred_fallthru
          _
      $region12: #{tpu_custom_call.1} parent=5 // pred_fallthru
        _
      %p242 = scmp.lt.s32.totalorder %s25, 4
      // Predicated region
      $region29: #{tpu_custom_call.1} parent=5 // pred_check
        %p243 = pneg %p242
      $region30: #{tpu_custom_call.1} parent=5 // pred_check_branch
        %245 = sbr.rel (%p243) target = $region32
      $region31: #{tpu_custom_call.1} parent=5 // pred_region
        // Predicated region
        $region33: #{tpu_custom_call.1} parent=31 // pred_check
          %p246 = pneg %p129
        $region34: #{tpu_custom_call.1} parent=31 // pred_check_branch
          %248 = sbr.rel (%p246) target = $region36
        $region35: #{tpu_custom_call.1} parent=31 // pred_region
          #allocation17 [shape = 'u32[6]{0}', space=smem, size = 0x18, scoped, tag = 'DMA stride descriptor']
          %s249 = sand.u32 %s119, 1
          %s250 = scalar_lea.sflag [#allocation3], %s249
          %s251 = sand.u32 %s119, 1
          %s252 = smul.addr %s251, 176
          %s253 = scalar_lea.vmem [#allocation12], %s252
          %s254 = smul.u32 2, %s25
          %256 = vsyncadd %s250, 0
          %s257 = smul.addr %s254, 8
          %s258 = scalar_lea.hbm %s4, %s257
          %s260 = sshll.u32 1, 14
          %s261 = sxor.u32 4294967295, %s260
          %s263 = sld [smem:[#allocation0]]
          %s264 = sadd.s32 2, %s263
          %s266 = sshll.u32 7, 26
          %s267 = sxor.u32 4294967295, %s266
          %s268 = sand.u32 0, %s267
          %s269 = sshll.u32 %s264, 26
          %s270 = sor.u32 %s268, %s269
          %s271 = sshll.u32 %s258, 4
          %s272 = int_to_ptr.hbm [resolvable:$true] %s271
          %s273 = sshll.u32 %s253, 4
          %s274 = int_to_ptr.vmem [resolvable:$true] %s273
          %280 = sst [smem:[#allocation17]] 1024
          %s281 = scalar_lea.smem [#allocation17], 1
          %282 = sst [smem:[%s281]] 256
          %s283 = scalar_lea.smem [#allocation17], 2
          %284 = sst [smem:[%s283]] 2
          %s285 = scalar_lea.smem [#allocation17], 3
          %286 = sst [smem:[%s285]] 128
          %s287 = scalar_lea.smem [#allocation17], 4
          %288 = sst [smem:[%s287]] 128
          %s289 = scalar_lea.smem [#allocation17], 5
          %290 = sst [smem:[%s289]] 8
          %292 = dma.general %s272, 2816, %s274, %s250, [#allocation16], [#allocation17], %s270, 0
        $region36: #{tpu_custom_call.1} parent=31 // pred_fallthru
          _
        // Predicated region
        $region37: #{tpu_custom_call.1} parent=31 // pred_check
          %p293 = pneg %p155
        $region38: #{tpu_custom_call.1} parent=31 // pred_check_branch
          %295 = sbr.rel (%p293) target = $region40
        $region39: #{tpu_custom_call.1} parent=31 // pred_region
          #allocation19 [shape = 'u32[6]{0}', space=smem, size = 0x18, scoped, tag = 'DMA stride descriptor']
          %s296 = sand.u32 %s145, 1
          %s297 = scalar_lea.sflag [#allocation14], %s296
          %s298 = sand.u32 %s145, 1
          %s299 = smul.addr %s298, 32
          %s300 = scalar_lea.vmem [#allocation13], %s299
          %s301 = smul.u32 2, %s25
          %303 = vsyncadd %s297, 0
          %s304 = smul.addr %s301, 8
          %s305 = scalar_lea.hbm %s5, %s304
          %s307 = sshll.u32 1, 14
          %s308 = sxor.u32 4294967295, %s307
          %s310 = sld [smem:[#allocation0]]
          %s311 = sadd.s32 2, %s310
          %s313 = sshll.u32 7, 26
          %s314 = sxor.u32 4294967295, %s313
          %s315 = sand.u32 0, %s314
          %s316 = sshll.u32 %s311, 26
          %s317 = sor.u32 %s315, %s316
          %s318 = sshll.u32 %s305, 4
          %s319 = int_to_ptr.hbm [resolvable:$true] %s318
          %s320 = sshll.u32 %s300, 4
          %s321 = int_to_ptr.vmem [resolvable:$true] %s320
          %327 = sst [smem:[#allocation19]] 1024
          %s328 = scalar_lea.smem [#allocation19], 1
          %329 = sst [smem:[%s328]] 256
          %s330 = scalar_lea.smem [#allocation19], 2
          %331 = sst [smem:[%s330]] 2
          %s332 = scalar_lea.smem [#allocation19], 3
          %333 = sst [smem:[%s332]] 128
          %s334 = scalar_lea.smem [#allocation19], 4
          %335 = sst [smem:[%s334]] 128
          %s336 = scalar_lea.smem [#allocation19], 5
          %337 = sst [smem:[%s336]] 8
          %339 = dma.general %s319, 512, %s321, %s297, [#allocation18], [#allocation19], %s317, 0
        $region40: #{tpu_custom_call.1} parent=31 // pred_fallthru
          _
      $region32: #{tpu_custom_call.1} parent=5 // pred_fallthru
        _
      %p340 = scmp.le.s32.totalorder 1, %s25
      %p341 = scmp.lt.s32.totalorder %s25, 5
      %p342 = pnand %p340, %p341
      %p343 = pneg %p342
      // Predicated region
      $region41: #{tpu_custom_call.1} parent=5 // pred_check
        _
      $region42: #{tpu_custom_call.1} parent=5 // pred_check_branch
        %345 = sbr.rel (%p342) target = $region44
      $region43: #{tpu_custom_call.1} parent=5 // pred_region
        %s346 = ssub.s32 %s25, 1
        // Predicated region
        $region45: #{tpu_custom_call.1} parent=43 // pred_check
          %p347 = pneg %p46
        $region46: #{tpu_custom_call.1} parent=43 // pred_check_branch
          %349 = sbr.rel (%p347) target = $region48
        $region47: #{tpu_custom_call.1} parent=43 // pred_region
          %351 = dma.done [#allocation5], 16
        $region48: #{tpu_custom_call.1} parent=43 // pred_fallthru
          _
        // Predicated region
        $region49: #{tpu_custom_call.1} parent=43 // pred_check
          %p352 = pneg %p67
        $region50: #{tpu_custom_call.1} parent=43 // pred_check_branch
          %354 = sbr.rel (%p352) target = $region52
        $region51: #{tpu_custom_call.1} parent=43 // pred_region
          %356 = dma.done [#allocation8], 16
        $region52: #{tpu_custom_call.1} parent=43 // pred_fallthru
          _
        // Predicated region
        $region53: #{tpu_custom_call.1} parent=43 // pred_check
          %p357 = pneg %p88
        $region54: #{tpu_custom_call.1} parent=43 // pred_check_branch
          %359 = sbr.rel (%p357) target = $region56
        $region55: #{tpu_custom_call.1} parent=43 // pred_region
          %361 = dma.done [#allocation6], 16
        $region56: #{tpu_custom_call.1} parent=43 // pred_fallthru
          _
        // Predicated region
        $region57: #{tpu_custom_call.1} parent=43 // pred_check
          %p362 = pneg %p109
        $region58: #{tpu_custom_call.1} parent=43 // pred_check_branch
          %364 = sbr.rel (%p362) target = $region60
        $region59: #{tpu_custom_call.1} parent=43 // pred_region
          %366 = dma.done [#allocation11], 16
        $region60: #{tpu_custom_call.1} parent=43 // pred_fallthru
          _
        %s367 = sand.u32 %s122, 1
        %s368 = scalar_lea.sflag [#allocation3], %s367
        %s369 = sand.u32 %s122, 1
        %s370 = smul.addr %s369, 176
        %s371 = scalar_lea.vmem [#allocation12], %s370
        // Predicated region
        $region61: #{tpu_custom_call.1} parent=43 // pred_check
          %p372 = pneg %p135
        $region62: #{tpu_custom_call.1} parent=43 // pred_check_branch
          %374 = sbr.rel (%p372) target = $region64
        $region63: #{tpu_custom_call.1} parent=43 // pred_region
          %376 = dma.done %s368, 2816
        $region64: #{tpu_custom_call.1} parent=43 // pred_fallthru
          _
        %s377 = sand.u32 %s148, 1
        %s378 = scalar_lea.sflag [#allocation14], %s377
        %s379 = sand.u32 %s148, 1
        %s380 = smul.addr %s379, 32
        %s381 = scalar_lea.vmem [#allocation13], %s380
        // Predicated region
        $region65: #{tpu_custom_call.1} parent=43 // pred_check
          %p382 = pneg %p161
        $region66: #{tpu_custom_call.1} parent=43 // pred_check_branch
          %384 = sbr.rel (%p382) target = $region68
        $region67: #{tpu_custom_call.1} parent=43 // pred_region
          %386 = dma.done %s378, 512
        $region68: #{tpu_custom_call.1} parent=43 // pred_fallthru
          _
        %387 = sfence
        %p388 = pneg %p46
        %p389 = pneg %p43
        %p390 = pneg %p67
        %p391 = pneg %p64
        %p392 = pneg %p88
        %p393 = pneg %p85
        %p394 = pneg %p109
        %p395 = pneg %p106
        %s396 = sand.u32 %s122, 1
        %s397 = scalar_lea.sflag [#allocation3], %s396
        %s398 = sand.u32 %s122, 1
        %s399 = smul.addr %s398, 176
        %s400 = scalar_lea.vmem [#allocation12], %s399
        %p401 = pneg %p135
        %p402 = pneg %p132
        %s403 = sand.u32 %s148, 1
        %s404 = scalar_lea.sflag [#allocation14], %s403
        %s405 = sand.u32 %s148, 1
        %s406 = smul.addr %s405, 32
        %s407 = scalar_lea.vmem [#allocation13], %s406
        %p408 = pneg %p161
        %p409 = pneg %p158
        %p410 = pneg %p187
        %p411 = pneg %p184
        %s412 = sand.u32 %s174, 1
        %s413 = scalar_lea.sflag [#allocation4], %s412
        %s414 = sand.u32 %s174, 1
        %s415 = smul.addr %s414, 32
        %s416 = scalar_lea.vmem [#allocation15], %s415
        %s417 = smul.u32 2, %s30
        %s418 = smul.u32 2, %s30
        %s419 = smul.u32 2, %s30
        %s420 = sld [smem:[#allocation10]]
        %s421 = sld [smem:[#allocation10 + $0x1]]
        %v422 = vld [vmem:[%s371] sm:$0xff]
        %v423 = vld [vmem:[%s371 + $0x8] sm:$0xff]
        %s424 = sld [smem:[#allocation2]]
        %v425 = vstv %s424
        %v426 = vsub.f32 %v422, %v425
        %v427 = vsub.f32 %v423, %v425
        %s428 = sld [smem:[#allocation9]]
        %v429 = vmul.f32 %v426, %v426
        %v430 = vmul.f32 %v427, %v427
        %s431 = sld [smem:[#allocation7]]
        %v432 = vstv %s431
        %v433 = vmul.f32 %v429, %v432
        %v434 = vmul.f32 %v430, %v432
        %v435 = vmul.f32 %v433, 1.442695
        %v436 = vpow.pop %v435
        %v437 = vmul.f32 %v434, 1.442695
        %v438 = vpow.pop %v437
        %v439 = vstv %s428
        %v440 = vmul.f32 %v439, %v436
        %v441 = vmul.f32 %v439, %v438
        %s442 = scalar_lea.vmem %s371, 16 [#allocation12]
        %v443 = vld [vmem:[%s442] sm:$0xff]
        %v444 = vld [vmem:[%s442 + $0x8] sm:$0xff]
        %s445 = sld [smem:[#allocation2 + $0x1]]
        %v446 = vstv %s445
        %v447 = vsub.f32 %v443, %v446
        %v448 = vsub.f32 %v444, %v446
        %s449 = sld [smem:[#allocation9 + $0x1]]
        %v450 = vmul.f32 %v447, %v447
        %v451 = vmul.f32 %v448, %v448
        %s452 = sld [smem:[#allocation7 + $0x1]]
        %v453 = vstv %s452
        %v454 = vmul.f32 %v450, %v453
        %v455 = vmul.f32 %v451, %v453
        %v456 = vmul.f32 %v454, 1.442695
        %v457 = vpow.pop %v456
        %v458 = vmul.f32 %v455, 1.442695
        %v459 = vpow.pop %v458
        %v460 = vstv %s449
        %v461 = vmul.f32 %v460, %v457
        %v462 = vmul.f32 %v460, %v459
        %v463 = vadd.f32 %v440, %v461
        %v464 = vadd.f32 %v441, %v462
        %s465 = scalar_lea.vmem %s371, 32 [#allocation12]
        %v466 = vld [vmem:[%s465] sm:$0xff]
        %v467 = vld [vmem:[%s465 + $0x8] sm:$0xff]
        %s468 = sld [smem:[#allocation2 + $0x2]]
        %v469 = vstv %s468
        %v470 = vsub.f32 %v466, %v469
        %v471 = vsub.f32 %v467, %v469
        %s472 = sld [smem:[#allocation9 + $0x2]]
        %v473 = vmul.f32 %v470, %v470
        %v474 = vmul.f32 %v471, %v471
        %s475 = sld [smem:[#allocation7 + $0x2]]
        %v476 = vstv %s475
        %v477 = vmul.f32 %v473, %v476
        %v478 = vmul.f32 %v474, %v476
        %v479 = vmul.f32 %v477, 1.442695
        %v480 = vpow.pop %v479
        %v481 = vmul.f32 %v478, 1.442695
        %v482 = vpow.pop %v481
        %v483 = vstv %s472
        %v484 = vmul.f32 %v483, %v480
        %v485 = vmul.f32 %v483, %v482
        %v486 = vadd.f32 %v463, %v484
        %v487 = vadd.f32 %v464, %v485
        %s488 = scalar_lea.vmem %s371, 48 [#allocation12]
        %v489 = vld [vmem:[%s488] sm:$0xff]
        %v490 = vld [vmem:[%s488 + $0x8] sm:$0xff]
        %s491 = sld [smem:[#allocation2 + $0x3]]
        %v492 = vstv %s491
        %v493 = vsub.f32 %v489, %v492
        %v494 = vsub.f32 %v490, %v492
        %s495 = sld [smem:[#allocation9 + $0x3]]
        %v496 = vmul.f32 %v493, %v493
        %v497 = vmul.f32 %v494, %v494
        %s498 = sld [smem:[#allocation7 + $0x3]]
        %v499 = vstv %s498
        %v500 = vmul.f32 %v496, %v499
        %v501 = vmul.f32 %v497, %v499
        %v502 = vmul.f32 %v500, 1.442695
        %v503 = vpow.pop %v502
        %v504 = vmul.f32 %v501, 1.442695
        %v505 = vpow.pop %v504
        %v506 = vstv %s495
        %v507 = vmul.f32 %v506, %v503
        %v508 = vmul.f32 %v506, %v505
        %v509 = vadd.f32 %v486, %v507
        %v510 = vadd.f32 %v487, %v508
        %s511 = scalar_lea.vmem %s371, 64 [#allocation12]
        %v512 = vld [vmem:[%s511] sm:$0xff]
        %v513 = vld [vmem:[%s511 + $0x8] sm:$0xff]
        %s514 = sld [smem:[#allocation2 + $0x4]]
        %v515 = vstv %s514
        %v516 = vsub.f32 %v512, %v515
        %v517 = vsub.f32 %v513, %v515
        %s518 = sld [smem:[#allocation9 + $0x4]]
        %v519 = vmul.f32 %v516, %v516
        %v520 = vmul.f32 %v517, %v517
        %s521 = sld [smem:[#allocation7 + $0x4]]
        %v522 = vstv %s521
        %v523 = vmul.f32 %v519, %v522
        %v524 = vmul.f32 %v520, %v522
        %v525 = vmul.f32 %v523, 1.442695
        %v526 = vpow.pop %v525
        %v527 = vmul.f32 %v524, 1.442695
        %v528 = vpow.pop %v527
        %v529 = vstv %s518
        %v530 = vmul.f32 %v529, %v526
        %v531 = vmul.f32 %v529, %v528
        %v532 = vadd.f32 %v509, %v530
        %v533 = vadd.f32 %v510, %v531
        %s534 = scalar_lea.vmem %s371, 80 [#allocation12]
        %v535 = vld [vmem:[%s534] sm:$0xff]
        %v536 = vld [vmem:[%s534 + $0x8] sm:$0xff]
        %s537 = sld [smem:[#allocation2 + $0x5]]
        %v538 = vstv %s537
        %v539 = vsub.f32 %v535, %v538
        %v540 = vsub.f32 %v536, %v538
        %s541 = sld [smem:[#allocation9 + $0x5]]
        %v542 = vmul.f32 %v539, %v539
        %v543 = vmul.f32 %v540, %v540
        %s544 = sld [smem:[#allocation7 + $0x5]]
        %v545 = vstv %s544
        %v546 = vmul.f32 %v542, %v545
        %v547 = vmul.f32 %v543, %v545
        %v548 = vmul.f32 %v546, 1.442695
        %v549 = vpow.pop %v548
        %v550 = vmul.f32 %v547, 1.442695
        %v551 = vpow.pop %v550
        %v552 = vstv %s541
        %v553 = vmul.f32 %v552, %v549
        %v554 = vmul.f32 %v552, %v551
        %v555 = vadd.f32 %v532, %v553
        %v556 = vadd.f32 %v533, %v554
        %s557 = scalar_lea.vmem %s371, 96 [#allocation12]
        %v558 = vld [vmem:[%s557] sm:$0xff]
        %v559 = vld [vmem:[%s557 + $0x8] sm:$0xff]
        %s560 = sld [smem:[#allocation2 + $0x6]]
        %v561 = vstv %s560
        %v562 = vsub.f32 %v558, %v561
        %v563 = vsub.f32 %v559, %v561
        %s564 = sld [smem:[#allocation9 + $0x6]]
        %v565 = vmul.f32 %v562, %v562
        %v566 = vmul.f32 %v563, %v563
        %s567 = sld [smem:[#allocation7 + $0x6]]
        %v568 = vstv %s567
        %v569 = vmul.f32 %v565, %v568
        %v570 = vmul.f32 %v566, %v568
        %v571 = vmul.f32 %v569, 1.442695
        %v572 = vpow.pop %v571
        %v573 = vmul.f32 %v570, 1.442695
        %v574 = vpow.pop %v573
        %v575 = vstv %s564
        %v576 = vmul.f32 %v575, %v572
        %v577 = vmul.f32 %v575, %v574
        %v578 = vadd.f32 %v555, %v576
        %v579 = vadd.f32 %v556, %v577
        %s580 = scalar_lea.vmem %s371, 112 [#allocation12]
        %v581 = vld [vmem:[%s580] sm:$0xff]
        %v582 = vld [vmem:[%s580 + $0x8] sm:$0xff]
        %s583 = sld [smem:[#allocation2 + $0x7]]
        %v584 = vstv %s583
        %v585 = vsub.f32 %v581, %v584
        %v586 = vsub.f32 %v582, %v584
        %s587 = sld [smem:[#allocation9 + $0x7]]
        %v588 = vmul.f32 %v585, %v585
        %v589 = vmul.f32 %v586, %v586
        %s590 = sld [smem:[#allocation7 + $0x7]]
        %v591 = vstv %s590
        %v592 = vmul.f32 %v588, %v591
        %v593 = vmul.f32 %v589, %v591
        %v594 = vmul.f32 %v592, 1.442695
        %v595 = vpow.pop %v594
        %v596 = vmul.f32 %v593, 1.442695
        %v597 = vpow.pop %v596
        %v598 = vstv %s587
        %v599 = vmul.f32 %v598, %v595
        %v600 = vmul.f32 %v598, %v597
        %v601 = vadd.f32 %v578, %v599
        %v602 = vadd.f32 %v579, %v600
        %s603 = scalar_lea.vmem %s371, 128 [#allocation12]
        %v604 = vld [vmem:[%s603] sm:$0xff]
        %v605 = vld [vmem:[%s603 + $0x8] sm:$0xff]
        %s606 = sld [smem:[#allocation2 + $0x8]]
        %v607 = vstv %s606
        %v608 = vsub.f32 %v604, %v607
        %v609 = vsub.f32 %v605, %v607
        %s610 = sld [smem:[#allocation9 + $0x8]]
        %v611 = vmul.f32 %v608, %v608
        %v612 = vmul.f32 %v609, %v609
        %s613 = sld [smem:[#allocation7 + $0x8]]
        %v614 = vstv %s613
        %v615 = vmul.f32 %v611, %v614
        %v616 = vmul.f32 %v612, %v614
        %v617 = vmul.f32 %v615, 1.442695
        %v618 = vpow.pop %v617
        %v619 = vmul.f32 %v616, 1.442695
        %v620 = vpow.pop %v619
        %v621 = vstv %s610
        %v622 = vmul.f32 %v621, %v618
        %v623 = vmul.f32 %v621, %v620
        %v624 = vadd.f32 %v601, %v622
        %v625 = vadd.f32 %v602, %v623
        %s626 = scalar_lea.vmem %s371, 144 [#allocation12]
        %v627 = vld [vmem:[%s626] sm:$0xff]
        %v628 = vld [vmem:[%s626 + $0x8] sm:$0xff]
        %s629 = sld [smem:[#allocation2 + $0x9]]
        %v630 = vstv %s629
        %v631 = vsub.f32 %v627, %v630
        %v632 = vsub.f32 %v628, %v630
        %s633 = sld [smem:[#allocation9 + $0x9]]
        %v634 = vmul.f32 %v631, %v631
        %v635 = vmul.f32 %v632, %v632
        %s636 = sld [smem:[#allocation7 + $0x9]]
        %v637 = vstv %s636
        %v638 = vmul.f32 %v634, %v637
        %v639 = vmul.f32 %v635, %v637
        %v640 = vmul.f32 %v638, 1.442695
        %v641 = vpow.pop %v640
        %v642 = vmul.f32 %v639, 1.442695
        %v643 = vpow.pop %v642
        %v644 = vstv %s633
        %v645 = vmul.f32 %v644, %v641
        %v646 = vmul.f32 %v644, %v643
        %v647 = vadd.f32 %v624, %v645
        %v648 = vadd.f32 %v625, %v646
        %v649 = vstv %s421
        %v650 = vsub.f32 %v647, %v649
        %v651 = vsub.f32 %v648, %v649
        %s652 = scalar_lea.vmem %s371, 160 [#allocation12]
        %v653 = vld [vmem:[%s652] sm:$0xff]
        %v654 = vld [vmem:[%s652 + $0x8] sm:$0xff]
        %v655 = vsub.f32 %v653, 1e-08
        %v656 = vsub.f32 %v654, 1e-08
        %v657 = vmax.f32 %v655, 0.0
        %v658 = vmax.f32 %v656, 0.0
        %v659 = vmin.f32 %v657, 1.0
        %v660 = vmin.f32 %v658, 1.0
        %v661 = vmul.f32 %v659, -10.0
        %v662 = vmul.f32 %v660, -10.0
        %v663 = vld [vmem:[%s381] sm:$0xff]
        %v664 = vld [vmem:[%s381 + $0x8] sm:$0xff]
        %v665 = vadd.f32 %v650, %v661
        %v666 = vadd.f32 %v651, %v662
        %v667 = vstv %s420
        %v668 = vmul.f32 %v667, %v665
        %v669 = vmul.f32 %v667, %v666
        %v670 = vadd.f32 %v663, %v668
        %v671 = vadd.f32 %v664, %v669
        %v672 = vmax.f32 %v670, 0.0
        %v673 = vmax.f32 %v671, 0.0
        %v674 = vmin.f32 %v672, 1.0
        %v675 = vmin.f32 %v673, 1.0
        %676 = vst [vmem:[%s416] sm:$0xff] %v674
        %677 = vst [vmem:[%s416 + $0x8] sm:$0xff] %v675
        %s678 = scalar_lea.vmem %s381, 16 [#allocation13]
        %v679 = vld [vmem:[%s678] sm:$0xff]
        %v680 = vld [vmem:[%s678 + $0x8] sm:$0xff]
        %v681 = vmax.f32 %v679, 0.0
        %v682 = vmax.f32 %v680, 0.0
        %v683 = vmin.f32 %v681, 1.0
        %v684 = vmin.f32 %v682, 1.0
        %s685 = scalar_lea.vmem %s416, 16 [#allocation15]
        %686 = vst [vmem:[%s685] sm:$0xff] %v683
        %687 = vst [vmem:[%s685 + $0x8] sm:$0xff] %v684
        %s688 = sand.u32 %s174, 1
        %s689 = scalar_lea.sflag [#allocation4], %s688
        %s690 = sand.u32 %s174, 1
        %s691 = smul.addr %s690, 32
        %s692 = scalar_lea.vmem [#allocation15], %s691
        // Predicated region
        $region69: #{tpu_custom_call.1} parent=43 // pred_check
          %p693 = pneg %p184
        $region70: #{tpu_custom_call.1} parent=43 // pred_check_branch
          %695 = sbr.rel (%p693) target = $region72
        $region71: #{tpu_custom_call.1} parent=43 // pred_region
          #allocation21 [shape = 'u32[6]{0}', space=smem, size = 0x18, scoped, tag = 'DMA stride descriptor']
          %s696 = smul.u32 2, %s30
          %698 = vsyncadd %s689, 0
          %s699 = smul.addr %s696, 8
          %s700 = scalar_lea.hbm %s6, %s699
          %s702 = sshll.u32 1, 14
          %s703 = sxor.u32 4294967295, %s702
          %s706 = sshll.u32 7, 18
          %s707 = sxor.u32 4294967295, %s706
          %s708 = sand.u32 0, %s707
          %s710 = sor.u32 %s708, 0
          %s711 = sshll.u32 %s692, 4
          %s712 = int_to_ptr.vmem [resolvable:$true] %s711
          %s713 = sshll.u32 %s700, 4
          %s714 = int_to_ptr.hbm [resolvable:$true] %s713
          %720 = sst [smem:[#allocation21]] 256
          %s721 = scalar_lea.smem [#allocation21], 1
          %722 = sst [smem:[%s721]] 1024
          %s723 = scalar_lea.smem [#allocation21], 2
          %724 = sst [smem:[%s723]] 2
          %s725 = scalar_lea.smem [#allocation21], 3
          %726 = sst [smem:[%s725]] 128
          %s727 = scalar_lea.smem [#allocation21], 4
          %728 = sst [smem:[%s727]] 128
          %s729 = scalar_lea.smem [#allocation21], 5
          %730 = sst [smem:[%s729]] 8
          %732 = dma.general %s712, 512, %s714, %s689, [#allocation20], [#allocation21], %s710, 0
        $region72: #{tpu_custom_call.1} parent=43 // pred_fallthru
          _
      $region44: #{tpu_custom_call.1} parent=5 // pred_fallthru
        _
      %p733 = scmp.le.s32.totalorder 2, %s25
      // Predicated region
      $region73: #{tpu_custom_call.1} parent=5 // pred_check
        %p734 = pneg %p733
      $region74: #{tpu_custom_call.1} parent=5 // pred_check_branch
        %736 = sbr.rel (%p734) target = $region76
      $region75: #{tpu_custom_call.1} parent=5 // pred_region
        %s737 = ssub.s32 %s25, 2
        // Predicated region
        $region77: #{tpu_custom_call.1} parent=75 // pred_check
          %p738 = pneg %p190
        $region78: #{tpu_custom_call.1} parent=75 // pred_check_branch
          %740 = sbr.rel (%p738) target = $region80
        $region79: #{tpu_custom_call.1} parent=75 // pred_region
          %s741 = sand.u32 %s175, 1
          %s742 = scalar_lea.sflag [#allocation4], %s741
          %s743 = sand.u32 %s175, 1
          %s744 = smul.addr %s743, 32
          %s745 = scalar_lea.vmem [#allocation15], %s744
          %747 = dma.done %s742, 512
        $region80: #{tpu_custom_call.1} parent=75 // pred_fallthru
          _
      $region76: #{tpu_custom_call.1} parent=5 // pred_fallthru
        _
    $region6: #{tpu_custom_call.1} parent=1 // loop_footer
      %s29 = sadd.s32 1, %s25
    $region7: #{tpu_custom_call.1} parent=1 // loop_footer_branch
      %24 = sbr.rel target = $region3
    $region8: #{tpu_custom_call.1} parent=1 // loop_exit
      _
    %748 = vsyncpa [#allocation3], 1
    %s749 = scalar_lea.sflag [#allocation3], 1
    %750 = vsyncpa %s749, 1
    %751 = vsyncpa [#allocation14], 1
    %s752 = scalar_lea.sflag [#allocation14], 1
    %753 = vsyncpa %s752, 1
    %754 = vsyncpa [#allocation4], 1
    %s755 = scalar_lea.sflag [#allocation4], 1
    %756 = vsyncpa %s755, 1
    %757 = vsyncpa [#allocation5], 1
    %s758 = scalar_lea.sflag [#allocation5], 1
    %759 = vsyncpa %s758, 1
    %760 = vsyncpa [#allocation8], 1
    %761 = vsyncpa [#allocation6], 1
    %s762 = scalar_lea.sflag [#allocation6], 1
    %763 = vsyncpa %s762, 1
    %764 = vsyncpa [#allocation11], 1

</llo_original>
